<compile_context>
chip_gen: v7x
topology: tpu7x:2x2x1
jax: 0.10.0
libtpu: 0.0.40
codegen_flags: <defaults>
</compile_context>

<pallas_src>
import functools

import jax
import jax.numpy as jnp
from jax.experimental import pallas as pl
from jax.experimental.pallas import tpu as pltpu


def _copy_kernel(x_ref, o_ref):
    # Same block shape for input and output: pure tile copy, no in-VMEM slice.
    o_ref[...] = x_ref[...]


def _slice_kernel(x_ref, o_ref, *, l_out: int):
    # Small-L path: full-length input block, static prefix slice of the lanes.
    o_ref[...] = x_ref[:, :l_out]


def chomp1d(x: jax.Array, chomp_size: int) -> jax.Array:
    """x: (N, C, L) -> (N, C, L - chomp_size), mirroring Chomp1d.forward."""
    n, c, l = x.shape
    l_out = l - chomp_size
    assert 0 < l_out, "chomp_size must be smaller than the length axis"

    r = n * c
    x2 = x.reshape(r, l)  # contiguous NCL -> (rows, L): free metadata reshape
    itemsize = jnp.dtype(x.dtype).itemsize

    # Sublane (row) tile: multiple of 8, capped at 256; full extent if rows < 8.
    if r >= 8:
        tm = min(256, (r // 8) * 8)
    else:
        tm = r

    vmem_limit = 32 * 1024 * 1024  # raises v5e's 16 MiB scoped default; <= others

    if l_out >= 128:
        # Tiled path: lane tile is a multiple of 128 (up to 1024) within L_out,
        # so only the prefix is ever read from HBM.
        tl = min(1024, (l_out // 128) * 128)
        grid = (pl.cdiv(r, tm), pl.cdiv(l_out, tl))
        bytes_accessed = 2 * r * l_out * itemsize  # read prefix + write output
        out2 = pl.pallas_call(
            _copy_kernel,
            out_shape=jax.ShapeDtypeStruct((r, l_out), x.dtype),
            grid=grid,
            in_specs=[pl.BlockSpec((tm, tl), lambda i, j: (i, j))],
            out_specs=pl.BlockSpec((tm, tl), lambda i, j: (i, j)),
            compiler_params=pltpu.CompilerParams(
                dimension_semantics=("parallel", "parallel"),
                vmem_limit_bytes=vmem_limit,
            ),
            cost_estimate=pl.CostEstimate(
                flops=0, transcendentals=0, bytes_accessed=bytes_accessed
            ),
        )(x2)
    else:
        # Small-L path: lane blocks equal the full array dims (allowed for any
        # size); tail read is negligible at these sizes.  Rows still tiled.
        grid = (pl.cdiv(r, tm),)
        bytes_accessed = r * (l + l_out) * itemsize
        out2 = pl.pallas_call(
            functools.partial(_slice_kernel, l_out=l_out),
            out_shape=jax.ShapeDtypeStruct((r, l_out), x.dtype),
            grid=grid,
            in_specs=[pl.BlockSpec((tm, l), lambda i: (i, 0))],
            out_specs=pl.BlockSpec((tm, l_out), lambda i: (i, 0)),
            compiler_params=pltpu.CompilerParams(
                dimension_semantics=("parallel",),
                vmem_limit_bytes=vmem_limit,
            ),
            cost_estimate=pl.CostEstimate(
                flops=0, transcendentals=0, bytes_accessed=bytes_accessed
            ),
        )(x2)

    return out2.reshape(n, c, l_out)


if __name__ == "__main__":
    key = jax.random.PRNGKey(0)
    k1, k2 = jax.random.split(key)

    # Test 1: small shape from the module spec (exercises the small-L path).
    N, C, L, chomp = 2, 4, 16, 3
    x_small = jax.random.normal(k1, (N, C, L), dtype=jnp.float32)
    out_small = jax.block_until_ready(chomp1d(x_small, chomp))
    ref_small = x_small[:, :, :-chomp]
    assert out_small.shape == (N, C, L - chomp)
    assert out_small.dtype == x_small.dtype
    assert jnp.array_equal(out_small, ref_small)

    # Test 2: modest longer sequence (exercises the tiled, prefix-only path
    # with a ragged final lane block).
    N2, C2, L2, chomp2 = 2, 8, 256, 5
    x_big = jax.random.normal(k2, (N2, C2, L2), dtype=jnp.float32)
    out_big = jax.block_until_ready(chomp1d(x_big, chomp2))
    ref_big = x_big[:, :, :-chomp2]
    assert out_big.shape == (N2, C2, L2 - chomp2)
    assert out_big.dtype == x_big.dtype
    assert jnp.array_equal(out_big, ref_big)

    print("KERNEL_OK")
</pallas_src>

<mosaic_0001>
module attributes {stable_mosaic.version = 11 : i64} {
  func.func @_slice_kernel(%arg0: i32, %arg1: memref<8x16xf32, #tpu.memory_space<vmem>>, %arg2: memref<8x13xf32, #tpu.memory_space<vmem>>) attributes {dimension_semantics = [#tpu.dimension_semantics<parallel>], iteration_bounds = array<i64: 1>, scalar_prefetch = 0 : i64, scratch_operands = 0 : i64, tpu.core_type = #tpu.core_type<tc>, window_params = [{transform_indices = @transform_0, window_bounds = array<i64: 8, 16>}, {transform_indices = @transform_1, window_bounds = array<i64: 8, 13>}]} {
    %c0 = arith.constant 0 : index
    %c0_0 = arith.constant 0 : index
    %0 = vector.load %arg1[%c0, %c0_0] : memref<8x16xf32, #tpu.memory_space<vmem>>, vector<8x13xf32>
    %c0_1 = arith.constant 0 : index
    %c0_2 = arith.constant 0 : index
    %1 = vector.load %arg2[%c0_1, %c0_2] : memref<8x13xf32, #tpu.memory_space<vmem>>, vector<8x13xf32>
    tpu.vector_store %arg2[%c0_1, %c0_2], %0 {strides = array<i32>} : memref<8x13xf32, #tpu.memory_space<vmem>>, vector<8x13xf32>,
    return
  }
  func.func @transform_0(%arg0: i32) -> (i32, i32) {
    %c0_i32 = arith.constant 0 : i32
    %c0_i32_0 = arith.constant 0 : i32
    return %arg0, %c0_i32 : i32, i32
  }
  func.func @transform_1(%arg0: i32) -> (i32, i32) {
    %c0_i32 = arith.constant 0 : i32
    %c0_i32_0 = arith.constant 0 : i32
    return %arg0, %c0_i32 : i32, i32
  }
}

</mosaic_0001>

<llo_original>
// kernel: tpu_custom_call.1
$region0: #{tpu_custom_call.1}
  #allocation0 [shape = 'u32[]', space=smem, size = 0x4, offset = 0x4, fixed_abs, tag = 'smem constant byte address 0x4 - core index']
  #allocation1 [shape = 'u32[144,128]{1,0:T(1,128)}', space=vmem, size = 0x12000, scoped, tag = 'internal scratch']
  %s0 = inlined_call_operand.hbm [shape: f32[8,16], index: 0, kind: input, shape index: {}]
  %s1 = inlined_call_operand.hbm [shape: f32[8,13], index: 1, kind: output, shape index: {}]
  %s2 = sld [smem:[#allocation0]]
  $region18: #{tpu_custom_call.1} parent=0
    _
  %s4 = ssub.s32 1, %s2
  %s5 = scalar_select 0, %s4, %s2
  $region1: #{tpu_custom_call.1} parent=0
    #allocation2 [shape = 'u8[4096]{0}', space=vmem, size = 0x1000, scoped, tag = 'input window, operand 0, single buffered']
    #allocation3 [shape = 's32[1]{0}', space=sflag, size = 0x4, scoped, tag = 'scoped memory for tpu_custom_call.1']
    #allocation4 [shape = 's32[1]{0}', space=sflag, size = 0x4, scoped, tag = 'scoped memory for tpu_custom_call.1']
    #allocation5 [shape = 'u8[4096]{0}', space=vmem, size = 0x1000, scoped, tag = 'output window, operand 0, single buffered']
    %6 = vsyncpa [#allocation3], 0
    %7 = vsyncpa [#allocation4], 0
    // Predicated region
    $region2: #{tpu_custom_call.1} parent=1 // pred_check
      _
    $region3: #{tpu_custom_call.1} parent=1 // pred_check_branch
      %9 = sbr.rel (0) target = $region5
    $region4: #{tpu_custom_call.1} parent=1 // pred_region
      %s11 = ssub.s32 128, 128
      %12 = vsyncadd [#allocation3], %s11
      %s14 = sshll.u32 [#allocation2], 4
      %s15 = int_to_ptr.vmem [resolvable:$true] %s14
      %17 = dma.hbm_to_vmem [thread:$0]  %s0, 128, %s15, [#allocation3]
    $region5: #{tpu_custom_call.1} parent=1 // pred_fallthru
      _
    // Predicated region
    $region6: #{tpu_custom_call.1} parent=1 // pred_check
      _
    $region7: #{tpu_custom_call.1} parent=1 // pred_check_branch
      %19 = sbr.rel (0) target = $region9
    $region8: #{tpu_custom_call.1} parent=1 // pred_region
      %20 = dma.done [#allocation3], 128
    $region9: #{tpu_custom_call.1} parent=1 // pred_fallthru
      _
    %v21 = vld [vmem:[#allocation2] sm:$0xff]
    %vm22 = vcmask 105472
    %23 = vst.msk [vmem:[#allocation5] sm:$0xff] %vm22, %v21
    // Predicated region
    $region10: #{tpu_custom_call.1} parent=1 // pred_check
      _
    $region11: #{tpu_custom_call.1} parent=1 // pred_check_branch
      %25 = sbr.rel (0) target = $region13
    $region12: #{tpu_custom_call.1} parent=1 // pred_region
      %s27 = ssub.s32 128, 128
      %28 = vsyncadd [#allocation4], %s27
      %s30 = sshll.u32 [#allocation5], 4
      %s31 = int_to_ptr.vmem [resolvable:$true] %s30
      %33 = dma.vmem_to_hbm [thread:$0]  %s31, 128, %s1, [#allocation4]
    $region13: #{tpu_custom_call.1} parent=1 // pred_fallthru
      _
    // Predicated region
    $region14: #{tpu_custom_call.1} parent=1 // pred_check
      _
    $region15: #{tpu_custom_call.1} parent=1 // pred_check_branch
      %35 = sbr.rel (0) target = $region17
    $region16: #{tpu_custom_call.1} parent=1 // pred_region
      %36 = dma.done [#allocation4], 128
    $region17: #{tpu_custom_call.1} parent=1 // pred_fallthru
      _
    %37 = vsyncpa [#allocation3], 1
    %38 = vsyncpa [#allocation4], 1

</llo_original>
